<compile_context>
chip_gen: v5e
topology: v5e:2x2
jax: 0.10.0
libtpu: 0.0.40
codegen_flags: <defaults>
</compile_context>

<pallas_src>
import functools

import jax
import jax.numpy as jnp
from jax.experimental import pallas as pl
from jax.experimental.pallas import tpu as pltpu


def _round_up(x, m):
    return ((x + m - 1) // m) * m


def _vmem_budget_and_row_cap():
    """Generation-aware scoped-VMEM limit and max batch-tile rows.

    v5e/v6e: 128 MiB physical VMEM  -> 96 MiB limit, up to 1024-row tiles.
    v7x:      64 MiB per TensorCore -> 48 MiB limit, up to  512-row tiles.
    Falls back to the conservative (v7x) numbers if the query is unavailable.
    """
    try:
        vmem_cap = int(pltpu.get_tpu_info().vmem_capacity_bytes)
    except Exception:  # conservative fallback
        vmem_cap = 64 * 1024 * 1024
    if vmem_cap >= 128 * 1024 * 1024:
        return 96 * 1024 * 1024, 1024
    return 48 * 1024 * 1024, 512


def _choose_tile_n(n_pad8, c, in_itemsize, vmem_limit, row_cap):
    """Largest batch tile that fits VMEM, while keeping >= 2 grid steps."""
    # Per tile row (bytes): 2 inputs x 2 pipeline buffers x input itemsize
    #                       + ~8 C-wide f32 temps inside the kernel body.
    bytes_per_row = c * (2 * 2 * in_itemsize + 8 * 4)
    budget = vmem_limit // 2            # headroom for labels, outputs, temps
    tile = budget // max(bytes_per_row, 1)
    tile = max(8, min(row_cap, (tile // 8) * 8))
    # >= 2 grid steps so the "parallel" axis shards across v7x's 2 TCs
    # (no effect on single-TC v5e/v6e).
    tile = min(tile, max(8, _round_up(max(n_pad8 // 2, 1), 8)))
    return min(tile, n_pad8)


def _kd_loss_kernel(z_ref, r_ref, y_ref, out_ref, *, temperature, n_valid, tile_n):
    T = temperature
    i = pl.program_id(0)

    z = z_ref[...].astype(jnp.float32)       # (TILE_N, C) student logits
    r = r_ref[...].astype(jnp.float32)       # (TILE_N, C) teacher logits
    y = y_ref[...]                           # (TILE_N, 1) int32 labels
    tn, C = z.shape

    # Valid-row mask (padding rows contribute 0 to the partial sum).
    row = jax.lax.broadcasted_iota(jnp.int32, (tn, 1), 0) + i * tile_n
    valid = row < n_valid                    # (TILE_N, 1) bool

    # ---- hard-label CE per row: logsumexp(z) - z[y] -------------------------
    z_max = jnp.max(z, axis=-1, keepdims=True)
    lse_z = z_max + jnp.log(jnp.sum(jnp.exp(z - z_max), axis=-1, keepdims=True))
    col = jax.lax.broadcasted_iota(jnp.int32, (tn, C), 1)
    z_at_y = jnp.sum(jnp.where(col == y, z, 0.0), axis=-1, keepdims=True)
    ce_row = lse_z - z_at_y                  # (TILE_N, 1)

    inv_T = 1.0 / T

    # ---- teacher tempered softmax (materialized; reused twice) --------------
    rT = r * inv_T
    r_max = jnp.max(rT, axis=-1, keepdims=True)
    e_r = jnp.exp(rT - r_max)
    s_r = jnp.sum(e_r, axis=-1, keepdims=True)
    inv_s_r = pl.reciprocal(s_r, approx=False)   # exact: stays within 1e-4 tol
    p_r = e_r * inv_s_r                          # term1 (teacher probs)

    # ---- student tempered softmax: never normalized elementwise -------------
    zT = z * inv_T
    zT_max = jnp.max(zT, axis=-1, keepdims=True)
    e_z = jnp.exp(zT - zT_max)
    s_z = jnp.sum(e_z, axis=-1, keepdims=True)
    inv_s_z = pl.reciprocal(s_z, approx=False)

    # ---- distill: CrossEntropyLoss(input=term1, soft target=term2) ----------
    # log_softmax is intentionally applied to the already-softmaxed p_r
    # (faithful to the PyTorch module).  Since sum(p_z) == 1:
    #   -sum_c p_z * log_softmax(p_r) = lse(p_r) - sum_c p_z * p_r
    # and max(p_r) == 1/s_r exactly (max(e_r) == exp(0) == 1), so no extra
    # cross-lane max reduction is needed for a stable lse(p_r).
    m_pr = inv_s_r
    lse_pr = m_pr + jnp.log(jnp.sum(jnp.exp(p_r - m_pr), axis=-1, keepdims=True))
    dot_zr = jnp.sum(e_z * p_r, axis=-1, keepdims=True) * inv_s_z
    dist_row = lse_pr - dot_zr               # (TILE_N, 1)

    combined = jnp.where(valid, ce_row + (T * T) * dist_row, 0.0)
    partial = jnp.sum(combined)

    # Lane-dense per-tile partial (unmasked stores); final sum/N in the wrapper.
    out_ref[...] = jnp.full(out_ref.shape, partial, dtype=out_ref.dtype)


def kd_loss(z, r, y, temperature=20.0):
    """z: (N, C) student logits, r: (N, C) teacher logits, y: (N,) int labels.

    z / r may be float32 or bfloat16; they are streamed in their native dtype
    (halving HBM traffic for bf16) and upcast to f32 inside the kernel.
    """
    n, c = z.shape
    assert r.shape == (n, c), (z.shape, r.shape)

    vmem_limit, row_cap = _vmem_budget_and_row_cap()
    in_itemsize = max(jnp.dtype(z.dtype).itemsize, jnp.dtype(r.dtype).itemsize)

    n_pad8 = _round_up(max(n, 1), 8)
    tile_n = _choose_tile_n(n_pad8, c, in_itemsize, vmem_limit, row_cap)
    n_pad = _round_up(n_pad8, tile_n)        # grid divides exactly: no OOB reads
    if n_pad != n:
        pad = n_pad - n
        z = jnp.pad(z, ((0, pad), (0, 0)))
        r = jnp.pad(r, ((0, pad), (0, 0)))
        y = jnp.pad(y, ((0, pad),))
    y2 = y.reshape(n_pad, 1).astype(jnp.int32)

    num_tiles = n_pad // tile_n

    kernel = functools.partial(
        _kd_loss_kernel,
        temperature=float(temperature),
        n_valid=n,
        tile_n=tile_n,
    )

    partials = pl.pallas_call(
        kernel,
        out_shape=jax.ShapeDtypeStruct((num_tiles, 8, 128), jnp.float32),
        grid_spec=pltpu.PrefetchScalarGridSpec(
            num_scalar_prefetch=0,
            grid=(num_tiles,),
            in_specs=[
                pl.BlockSpec((tile_n, c), lambda i: (i, 0)),   # z tile
                pl.BlockSpec((tile_n, c), lambda i: (i, 0)),   # r tile
                pl.BlockSpec((tile_n, 1), lambda i: (i, 0)),   # labels tile
            ],
            out_specs=pl.BlockSpec((1, 8, 128), lambda i: (i, 0, 0)),
        ),
        compiler_params=pltpu.CompilerParams(
            dimension_semantics=("parallel",),
            vmem_limit_bytes=vmem_limit,
        ),
    )(z, r, y2)

    # Tiny final reduction in plain JAX: mean over the TRUE batch size.
    return jnp.sum(partials[:, 0, 0]) / n


def _kd_loss_ref(z, r, y, temperature=20.0):
    """Pure-JAX reference mirroring the PyTorch module exactly."""
    T = float(temperature)
    z = z.astype(jnp.float32)
    r = r.astype(jnp.float32)
    lse_z = jax.scipy.special.logsumexp(z, axis=-1)
    z_at_y = jnp.take_along_axis(z, y[:, None], axis=-1)[:, 0]
    default_loss = jnp.mean(lse_z - z_at_y)
    p_r = jax.nn.softmax(r / T, axis=-1)
    p_z = jax.nn.softmax(z / T, axis=-1)
    log_sm_pr = jax.nn.log_softmax(p_r, axis=-1)
    distill = T * T * jnp.mean(-jnp.sum(p_z * log_sm_pr, axis=-1))
    return default_loss + distill


if __name__ == "__main__":
    key = jax.random.PRNGKey(0)

    # Case 1: small aligned batch, float32.
    kz, kr, ky = jax.random.split(key, 3)
    N, C = 8, 16
    z = jax.random.normal(kz, (N, C), dtype=jnp.float32)
    r = jax.random.normal(kr, (N, C), dtype=jnp.float32)
    y = jax.random.randint(ky, (N,), 0, C, dtype=jnp.int32)
    loss = jax.block_until_ready(kd_loss(z, r, y, temperature=20.0))
    ref = _kd_loss_ref(z, r, y, temperature=20.0)
    assert jnp.allclose(loss, ref, rtol=1e-4, atol=1e-4), (loss, ref)

    # Case 2: non-multiple-of-8 batch to exercise padding/masking.
    kz2, kr2, ky2 = jax.random.split(jax.random.PRNGKey(1), 3)
    N2, C2 = 13, 16
    z2 = jax.random.normal(kz2, (N2, C2), dtype=jnp.float32)
    r2 = jax.random.normal(kr2, (N2, C2), dtype=jnp.float32)
    y2 = jax.random.randint(ky2, (N2,), 0, C2, dtype=jnp.int32)
    loss2 = jax.block_until_ready(kd_loss(z2, r2, y2, temperature=20.0))
    ref2 = _kd_loss_ref(z2, r2, y2, temperature=20.0)
    assert jnp.allclose(loss2, ref2, rtol=1e-4, atol=1e-4), (loss2, ref2)

    # Case 3: bfloat16 logits streamed natively (kernel upcasts in VMEM).
    z3 = z2.astype(jnp.bfloat16)
    r3 = r2.astype(jnp.bfloat16)
    loss3 = jax.block_until_ready(kd_loss(z3, r3, y2, temperature=20.0))
    ref3 = _kd_loss_ref(z3.astype(jnp.float32), r3.astype(jnp.float32), y2, 20.0)
    assert jnp.allclose(loss3, ref3, rtol=1e-4, atol=1e-4), (loss3, ref3)

    print("KERNEL_OK")
</pallas_src>

<mosaic_0001>
module attributes {stable_mosaic.version = 11 : i64} {
  func.func @_kd_loss_kernel(%arg0: i32, %arg1: memref<8x16xf32, #tpu.memory_space<vmem>>, %arg2: memref<8x16xf32, #tpu.memory_space<vmem>>, %arg3: memref<8x1xi32, #tpu.memory_space<vmem>>, %arg4: memref<1x8x128xf32, #tpu.memory_space<vmem>>) attributes {dimension_semantics = [#tpu.dimension_semantics<parallel>], iteration_bounds = array<i64: 1>, scalar_prefetch = 0 : i64, scratch_operands = 0 : i64, tpu.core_type = #tpu.core_type<tc>, window_params = [{transform_indices = @transform_0, window_bounds = array<i64: 8, 16>}, {transform_indices = @transform_1, window_bounds = array<i64: 8, 16>}, {transform_indices = @transform_2, window_bounds = array<i64: 8, 1>}, {transform_indices = @transform_3, window_bounds = array<i64: 1, 8, 128>}]} {
    %c0 = arith.constant 0 : index
    %c0_0 = arith.constant 0 : index
    %0 = vector.load %arg1[%c0, %c0_0] : memref<8x16xf32, #tpu.memory_space<vmem>>, vector<8x16xf32>
    %c0_1 = arith.constant 0 : index
    %c0_2 = arith.constant 0 : index
    %1 = vector.load %arg2[%c0_1, %c0_2] : memref<8x16xf32, #tpu.memory_space<vmem>>, vector<8x16xf32>
    %c0_3 = arith.constant 0 : index
    %c0_4 = arith.constant 0 : index
    %2 = vector.load %arg3[%c0_3, %c0_4] : memref<8x1xi32, #tpu.memory_space<vmem>>, vector<8x1xi32>
    %3 = tpu.iota {dimensions = array<i32: 0>} : vector<8x1xi32>
    %c8_i32 = arith.constant 8 : i32
    %4 = arith.muli %arg0, %c8_i32 : i32
    %5 = vector.broadcast %4 : i32 to vector<8x1xi32>
    %6 = arith.addi %3, %5 : vector<8x1xi32>
    %c8_i32_5 = arith.constant 8 : i32
    %7 = vector.broadcast %c8_i32_5 : i32 to vector<8x1xi32>
    %8 = arith.cmpi slt, %6, %7 : vector<8x1xi32>
    %cst = arith.constant dense<0xFF800000> : vector<8xf32>
    %9 = vector.multi_reduction <maximumf>, %0, %cst [1] : vector<8x16xf32> to vector<8xf32>
    %10 = vector.shape_cast %9 : vector<8xf32> to vector<8x1xf32>
    %11 = vector.broadcast %10 : vector<8x1xf32> to vector<8x16xf32>
    %12 = arith.subf %0, %11 : vector<8x16xf32>
    %13 = math.exp %12 : vector<8x16xf32>
    %cst_6 = arith.constant dense<0.000000e+00> : vector<8xf32>
    %14 = vector.multi_reduction <add>, %13, %cst_6 [1] : vector<8x16xf32> to vector<8xf32>
    %15 = vector.shape_cast %14 : vector<8xf32> to vector<8x1xf32>
    %16 = math.log %15 : vector<8x1xf32>
    %17 = arith.addf %10, %16 : vector<8x1xf32>
    %18 = tpu.iota {dimensions = array<i32: 1>} : vector<8x16xi32>
    %19 = vector.broadcast %2 : vector<8x1xi32> to vector<8x16xi32>
    %20 = arith.cmpi eq, %18, %19 : vector<8x16xi32>
    %cst_7 = arith.constant 0.000000e+00 : f32
    %21 = vector.broadcast %cst_7 : f32 to vector<8x16xf32>
    %22 = arith.select %20, %0, %21 : vector<8x16xi1>, vector<8x16xf32>
    %cst_8 = arith.constant dense<0.000000e+00> : vector<8xf32>
    %23 = vector.multi_reduction <add>, %22, %cst_8 [1] : vector<8x16xf32> to vector<8xf32>
    %24 = vector.shape_cast %23 : vector<8xf32> to vector<8x1xf32>
    %25 = arith.subf %17, %24 : vector<8x1xf32>
    %cst_9 = arith.constant 5.000000e-02 : f32
    %26 = vector.broadcast %cst_9 : f32 to vector<8x16xf32>
    %27 = arith.mulf %1, %26 : vector<8x16xf32>
    %cst_10 = arith.constant dense<0xFF800000> : vector<8xf32>
    %28 = vector.multi_reduction <maximumf>, %27, %cst_10 [1] : vector<8x16xf32> to vector<8xf32>
    %29 = vector.shape_cast %28 : vector<8xf32> to vector<8x1xf32>
    %30 = vector.broadcast %29 : vector<8x1xf32> to vector<8x16xf32>
    %31 = arith.subf %27, %30 : vector<8x16xf32>
    %32 = math.exp %31 : vector<8x16xf32>
    %cst_11 = arith.constant dense<0.000000e+00> : vector<8xf32>
    %33 = vector.multi_reduction <add>, %32, %cst_11 [1] : vector<8x16xf32> to vector<8xf32>
    %34 = vector.shape_cast %33 : vector<8xf32> to vector<8x1xf32>
    %35 = tpu.reciprocal %34 : vector<8x1xf32> -> vector<8x1xf32>
    %36 = vector.broadcast %35 : vector<8x1xf32> to vector<8x16xf32>
    %37 = arith.mulf %32, %36 : vector<8x16xf32>
    %cst_12 = arith.constant 5.000000e-02 : f32
    %38 = vector.broadcast %cst_12 : f32 to vector<8x16xf32>
    %39 = arith.mulf %0, %38 : vector<8x16xf32>
    %cst_13 = arith.constant dense<0xFF800000> : vector<8xf32>
    %40 = vector.multi_reduction <maximumf>, %39, %cst_13 [1] : vector<8x16xf32> to vector<8xf32>
    %41 = vector.shape_cast %40 : vector<8xf32> to vector<8x1xf32>
    %42 = vector.broadcast %41 : vector<8x1xf32> to vector<8x16xf32>
    %43 = arith.subf %39, %42 : vector<8x16xf32>
    %44 = math.exp %43 : vector<8x16xf32>
    %cst_14 = arith.constant dense<0.000000e+00> : vector<8xf32>
    %45 = vector.multi_reduction <add>, %44, %cst_14 [1] : vector<8x16xf32> to vector<8xf32>
    %46 = vector.shape_cast %45 : vector<8xf32> to vector<8x1xf32>
    %47 = tpu.reciprocal %46 : vector<8x1xf32> -> vector<8x1xf32>
    %48 = vector.broadcast %35 : vector<8x1xf32> to vector<8x16xf32>
    %49 = arith.subf %37, %48 : vector<8x16xf32>
    %50 = math.exp %49 : vector<8x16xf32>
    %cst_15 = arith.constant dense<0.000000e+00> : vector<8xf32>
    %51 = vector.multi_reduction <add>, %50, %cst_15 [1] : vector<8x16xf32> to vector<8xf32>
    %52 = vector.shape_cast %51 : vector<8xf32> to vector<8x1xf32>
    %53 = math.log %52 : vector<8x1xf32>
    %54 = arith.addf %35, %53 : vector<8x1xf32>
    %55 = arith.mulf %44, %37 : vector<8x16xf32>
    %cst_16 = arith.constant dense<0.000000e+00> : vector<8xf32>
    %56 = vector.multi_reduction <add>, %55, %cst_16 [1] : vector<8x16xf32> to vector<8xf32>
    %57 = vector.shape_cast %56 : vector<8xf32> to vector<8x1xf32>
    %58 = arith.mulf %57, %47 : vector<8x1xf32>
    %59 = arith.subf %54, %58 : vector<8x1xf32>
    %cst_17 = arith.constant 4.000000e+02 : f32
    %60 = vector.broadcast %cst_17 : f32 to vector<8x1xf32>
    %61 = arith.mulf %60, %59 : vector<8x1xf32>
    %62 = arith.addf %25, %61 : vector<8x1xf32>
    %cst_18 = arith.constant 0.000000e+00 : f32
    %63 = vector.broadcast %cst_18 : f32 to vector<8x1xf32>
    %64 = arith.select %8, %62, %63 : vector<8x1xi1>, vector<8x1xf32>
    %65 = vector.shape_cast %64 : vector<8x1xf32> to vector<1x8x1xf32>
    %cst_19 = arith.constant dense<0.000000e+00> : vector<1xf32>
    %66 = vector.multi_reduction <add>, %65, %cst_19 [1, 2] : vector<1x8x1xf32> to vector<1xf32>
    %67 = vector.shape_cast %66 : vector<1xf32> to vector<1x1x1xf32>
    %68 = vector.extract %67[0, 0, 0] : f32 from vector<1x1x1xf32>
    %69 = vector.broadcast %68 : f32 to vector<1x8x128xf32>
    %c0_20 = arith.constant 0 : index
    %c0_21 = arith.constant 0 : index
    %c0_22 = arith.constant 0 : index
    %70 = vector.load %arg4[%c0_20, %c0_21, %c0_22] : memref<1x8x128xf32, #tpu.memory_space<vmem>>, vector<1x8x128xf32>
    tpu.vector_store %arg4[%c0_20, %c0_21, %c0_22], %69 {strides = array<i32>} : memref<1x8x128xf32, #tpu.memory_space<vmem>>, vector<1x8x128xf32>,
    return
  }
  func.func @transform_0(%arg0: i32) -> (i32, i32) {
    %c0_i32 = arith.constant 0 : i32
    %c0_i32_0 = arith.constant 0 : i32
    return %arg0, %c0_i32 : i32, i32
  }
  func.func @transform_1(%arg0: i32) -> (i32, i32) {
    %c0_i32 = arith.constant 0 : i32
    %c0_i32_0 = arith.constant 0 : i32
    return %arg0, %c0_i32 : i32, i32
  }
  func.func @transform_2(%arg0: i32) -> (i32, i32) {
    %c0_i32 = arith.constant 0 : i32
    %c0_i32_0 = arith.constant 0 : i32
    return %arg0, %c0_i32 : i32, i32
  }
  func.func @transform_3(%arg0: i32) -> (i32, i32, i32) {
    %c0_i32 = arith.constant 0 : i32
    %c0_i32_0 = arith.constant 0 : i32
    %c0_i32_1 = arith.constant 0 : i32
    return %arg0, %c0_i32, %c0_i32_0 : i32, i32, i32
  }
}

</mosaic_0001>

<llo_original>
// kernel: tpu_custom_call.1
$region0: #{tpu_custom_call.1}
  #allocation0 [shape = 'u32[]', space=smem, size = 0x4, offset = 0x4, fixed_abs, tag = 'smem constant byte address 0x4 - core index']
  #allocation1 [shape = 'u32[72,128]{1,0:T(1,128)}', space=vmem, size = 0x9000, scoped, tag = 'internal scratch']
  %s0 = inlined_call_operand.vmem [shape: f32[8,16], index: 0, kind: input, shape index: {}]
  %s1 = inlined_call_operand.hbm [shape: f32[8,16], index: 1, kind: input, shape index: {}]
  %s2 = inlined_call_operand.vmem [shape: s32[8,1], index: 2, kind: input, shape index: {}]
  %s3 = inlined_call_operand.hbm [shape: f32[1,8,128], index: 3, kind: output, shape index: {}]
  %s4 = sld [smem:[#allocation0]]
  $region26: #{tpu_custom_call.1} parent=0
    _
  %s6 = ssub.s32 1, %s4
  %s7 = scalar_select 0, %s6, %s4
  $region1: #{tpu_custom_call.1} parent=0
    #allocation2 [shape = 'u8[4096]{0}', space=vmem, size = 0x1000, scoped, tag = 'input window, operand 1, single buffered']
    #allocation3 [shape = 's32[1]{0}', space=sflag, size = 0x4, scoped, tag = 'scoped memory for tpu_custom_call.1']
    #allocation4 [shape = 's32[1]{0}', space=sflag, size = 0x4, scoped, tag = 'scoped memory for tpu_custom_call.1']
    #allocation5 [shape = 'u8[4096]{0}', space=vmem, size = 0x1000, scoped, tag = 'output window, operand 0, single buffered']
    %8 = vsyncpa [#allocation3], 0
    %9 = vsyncpa [#allocation4], 0
    // Predicated region
    $region2: #{tpu_custom_call.1} parent=1 // pred_check
      _
    $region3: #{tpu_custom_call.1} parent=1 // pred_check_branch
      %11 = sbr.rel (0) target = $region5
    $region4: #{tpu_custom_call.1} parent=1 // pred_region
      _
    $region5: #{tpu_custom_call.1} parent=1 // pred_fallthru
      _
    // Predicated region
    $region6: #{tpu_custom_call.1} parent=1 // pred_check
      _
    $region7: #{tpu_custom_call.1} parent=1 // pred_check_branch
      %13 = sbr.rel (0) target = $region9
    $region8: #{tpu_custom_call.1} parent=1 // pred_region
      %15 = vsyncadd [#allocation3], 0
      %s17 = sshll.u32 %s1, 4
      %s18 = int_to_ptr.hbm [resolvable:$true] %s17
      %s19 = sshll.u32 [#allocation2], 4
      %s20 = int_to_ptr.vmem [resolvable:$true] %s19
      %22 = dma.hbm_to_vmem [thread:$0]  %s18, 128, %s20, [#allocation3]
    $region9: #{tpu_custom_call.1} parent=1 // pred_fallthru
      _
    // Predicated region
    $region10: #{tpu_custom_call.1} parent=1 // pred_check
      _
    $region11: #{tpu_custom_call.1} parent=1 // pred_check_branch
      %24 = sbr.rel (0) target = $region13
    $region12: #{tpu_custom_call.1} parent=1 // pred_region
      _
    $region13: #{tpu_custom_call.1} parent=1 // pred_fallthru
      _
    // Predicated region
    $region14: #{tpu_custom_call.1} parent=1 // pred_check
      _
    $region15: #{tpu_custom_call.1} parent=1 // pred_check_branch
      %26 = sbr.rel (0) target = $region17
    $region16: #{tpu_custom_call.1} parent=1 // pred_region
      %28 = dma.done [#allocation3], 128
    $region17: #{tpu_custom_call.1} parent=1 // pred_fallthru
      _
    %v29 = vld [vmem:[%s0] sm:$0xff]
    %v30 = vld [vmem:[#allocation2] sm:$0xff]
    %v31 = vld [vmem:[%s2] sm:$0xff]
    %v32 = vlaneseq
    %v33 = vshrl.u32 %v32, 7
    %s34 = smul.u32 0, 8
    %v35 = vstv %s34
    %v36 = vadd.s32 %v33, %v35
    %vm37 = vcmp.lt.s32.totalorder %v36, 8
    %vm38 = vcmask 130048
    %v39 = vsel %vm38, %v29, -inf
    %40 = vmax.xlane.f32.xlu0 %v39
    %v41 = vpop.xlane.xlu0 %40
    %v42 = vsub.f32 %v29, %v41
    %v43 = vmul.f32 %v42, 1.442695
    %v44 = vpow.pop %v43
    %v45 = vsel %vm38, %v44, 0.0
    %46 = vadd.xlane.f32.xlu0 %v45
    %v47 = vpop.xlane.xlu0 %46
    %v48 = vlog2.pop %v47
    %v49 = vmul.f32 %v48, 0.6931472
    %v50 = vadd.f32 %v41, %v49
    %v51 = vlaneseq
    %v52 = vand.u32 %v51, 127
    %53 = vset.pattern.permute.xlu0 0
    %54 = vperm.xlu0 %53, %v31
    %v55 = vpop.permute.xlu0 %54
    %vm56 = vcmp.eq.s32.totalorder %v52, %v55
    %v57 = vsel %vm56, %v29, 0.0
    %v58 = vsel %vm38, %v57, 0.0
    %59 = vadd.xlane.f32.xlu0 %v58
    %v60 = vpop.xlane.xlu0 %59
    %v61 = vsub.f32 %v50, %v60
    %v62 = vmul.f32 %v30, 0.05
    %v63 = vsel %vm38, %v62, -inf
    %64 = vmax.xlane.f32.xlu0 %v63
    %v65 = vpop.xlane.xlu0 %64
    %v66 = vsub.f32 %v62, %v65
    %v67 = vmul.f32 %v66, 1.442695
    %v68 = vpow.pop %v67
    %v69 = vsel %vm38, %v68, 0.0
    %70 = vadd.xlane.f32.xlu0 %v69
    %v71 = vpop.xlane.xlu0 %70
    %v72 = vrcp.pop %v71
    %v73 = vmul.f32 %v71, %v72
    %v74 = vsub.f32 1.0, %v73
    %v75 = vmul.f32 %v72, %v74
    %v76 = vadd.f32 %v72, %v75
    %vm77 = vweird.f32 %v71
    %vm78 = vweird.f32 %v72
    %vm79 = vmor %vm77, %vm78
    %v80 = vsel %vm79, %v72, %v76
    %v81 = vand.u32 2147483647, %v71
    %vm82 = vcmp.eq.f32.partialorder %v81, 8.507059e+37
    %v83 = vand.u32 %v71, 2147483648
    %v84 = vor.u32 1.1754944e-38, %v83
    %v85 = vsel %vm82, %v84, %v80
    %v86 = vmul.f32 %v68, %v85
    %v87 = vmul.f32 %v29, 0.05
    %v88 = vsel %vm38, %v87, -inf
    %89 = vmax.xlane.f32.xlu0 %v88
    %v90 = vpop.xlane.xlu0 %89
    %v91 = vsub.f32 %v87, %v90
    %v92 = vmul.f32 %v91, 1.442695
    %v93 = vpow.pop %v92
    %v94 = vsel %vm38, %v93, 0.0
    %95 = vadd.xlane.f32.xlu0 %v94
    %v96 = vpop.xlane.xlu0 %95
    %v97 = vrcp.pop %v96
    %v98 = vmul.f32 %v96, %v97
    %v99 = vsub.f32 1.0, %v98
    %v100 = vmul.f32 %v97, %v99
    %v101 = vadd.f32 %v97, %v100
    %vm102 = vweird.f32 %v96
    %vm103 = vweird.f32 %v97
    %vm104 = vmor %vm102, %vm103
    %v105 = vsel %vm104, %v97, %v101
    %v106 = vand.u32 2147483647, %v96
    %vm107 = vcmp.eq.f32.partialorder %v106, 8.507059e+37
    %v108 = vand.u32 %v96, 2147483648
    %v109 = vor.u32 1.1754944e-38, %v108
    %v110 = vsel %vm107, %v109, %v105
    %v111 = vsub.f32 %v86, %v85
    %v112 = vmul.f32 %v111, 1.442695
    %v113 = vpow.pop %v112
    %v114 = vsel %vm38, %v113, 0.0
    %115 = vadd.xlane.f32.xlu0 %v114
    %v116 = vpop.xlane.xlu0 %115
    %v117 = vlog2.pop %v116
    %v118 = vmul.f32 %v117, 0.6931472
    %v119 = vadd.f32 %v85, %v118
    %v120 = vmul.f32 %v93, %v86
    %v121 = vsel %vm38, %v120, 0.0
    %122 = vadd.xlane.f32.xlu0 %v121
    %v123 = vpop.xlane.xlu0 %122
    %v124 = vmul.f32 %v123, %v110
    %v125 = vsub.f32 %v119, %v124
    %v126 = vmul.f32 %v125, 400.0
    %v127 = vadd.f32 %v61, %v126
    %v128 = vsel %vm37, %v127, 0.0
    %vm129 = vcmask 7168
    %v130 = vsel %vm129, %v128, 0.0
    %131 = vadd.xlane.f32.xlu0 %v130
    %v132 = vpop.xlane.xlu0 %131
    %v133 = vrot.slane %v132, 4
    %v134 = vadd.f32 %v132, %v133
    %v135 = vrot.slane %v134, 2
    %v136 = vadd.f32 %v134, %v135
    %v137 = vrot.slane %v136, 1
    %v138 = vadd.f32 %v136, %v137
    %s139 = vtos %v138
    %v140 = vstv %s139
    %141 = vst [vmem:[#allocation5] sm:$0xff] %v140
    // Predicated region
    $region18: #{tpu_custom_call.1} parent=1 // pred_check
      _
    $region19: #{tpu_custom_call.1} parent=1 // pred_check_branch
      %143 = sbr.rel (0) target = $region21
    $region20: #{tpu_custom_call.1} parent=1 // pred_region
      %145 = vsyncadd [#allocation4], 0
      %s147 = sshll.u32 [#allocation5], 4
      %s148 = int_to_ptr.vmem [resolvable:$true] %s147
      %s149 = sshll.u32 %s3, 4
      %s150 = int_to_ptr.hbm [resolvable:$true] %s149
      %152 = dma.vmem_to_hbm [thread:$0]  %s148, 128, %s150, [#allocation4]
    $region21: #{tpu_custom_call.1} parent=1 // pred_fallthru
      _
    // Predicated region
    $region22: #{tpu_custom_call.1} parent=1 // pred_check
      _
    $region23: #{tpu_custom_call.1} parent=1 // pred_check_branch
      %154 = sbr.rel (0) target = $region25
    $region24: #{tpu_custom_call.1} parent=1 // pred_region
      %156 = dma.done [#allocation4], 128
    $region25: #{tpu_custom_call.1} parent=1 // pred_fallthru
      _
    %157 = vsyncpa [#allocation3], 1
    %158 = vsyncpa [#allocation4], 1

</llo_original>
